<compile_context>
chip_gen: v5e
topology: v5e:2x2
jax: 0.10.0
libtpu: 0.0.40
codegen_flags: <defaults>
</compile_context>

<pallas_src>
import jax
import jax.numpy as jnp
from jax.experimental import pallas as pl
from jax.experimental.pallas import tpu as pltpu


def _round_up(x: int, m: int) -> int:
    return -(-x // m) * m


def _make_dice_kernel(n_steps: int, tile_hw: int, hw: int, needs_mask: bool):
    def kernel(pred_ref, target_ref, out_ref):
        # pred_ref / target_ref: (N, C, tile_hw) blocks in VMEM (auto-pipelined).
        # out_ref: (N, tile_hw) f32 partial-sum block for this parallel group,
        #          resident across the whole streaming axis (accumulator).
        i = pl.program_id(1)

        @pl.when(i == 0)
        def _():
            out_ref[...] = jnp.zeros_like(out_ref)

        # Upcast on load: bf16 inputs halve HBM bytes, all math stays f32.
        p = pred_ref[...].astype(jnp.float32)
        t = target_ref[...].astype(jnp.float32)

        num = jnp.sum(p * t, axis=1) + 1.0            # (N, tile_hw)
        den = jnp.sum(p * p + t * t, axis=1) + 1.0    # (N, tile_hw)
        term = (den - num) * pl.reciprocal(den)       # == 1 - num/den (exact)

        if needs_mask:
            # Only the globally-last tile can be partial; lanes past the true
            # H*W extent hold garbage, so zero their contribution.
            base = (pl.program_id(0) * n_steps + i) * tile_hw
            lane = jax.lax.broadcasted_iota(jnp.int32, term.shape, 1)
            term = jnp.where(base + lane < hw, term, 0.0)

        out_ref[...] += term

    return kernel


def dice_loss(pred: jax.Array, target: jax.Array, *, max_tile_hw: int | None = None) -> jax.Array:
    """pred, target: (N, C, H, W) float32 or bfloat16. Returns scalar f32 loss."""
    assert pred.shape == target.shape
    N, C, H, W = pred.shape
    HW = H * W
    LANE = 128

    p = pred.reshape(N, C, HW)
    t = target.reshape(N, C, HW)

    # --- Per-generation VMEM sizing -------------------------------------
    try:
        vmem_cap = int(getattr(pltpu.get_tpu_info(), "vmem_capacity_bytes", 0) or 0)
    except Exception:
        vmem_cap = 0
    if vmem_cap == 0:
        vmem_cap = 64 << 20  # unknown -> assume the smaller (v7x-class) VMEM
    if vmem_cap <= (64 << 20):          # v7x-class: 64 MiB VMEM per TensorCore
        vmem_budget = 12 << 20
        vmem_limit = 48 << 20
    else:                               # v5e / v6e: 128 MiB VMEM
        vmem_budget = 24 << 20
        vmem_limit = 64 << 20

    # --- Padding-aware tile sizing ---------------------------------------
    # VMEM stores the trailing (C, tile_hw) dims in (8*(4/itemsize), 128)
    # tiles, so small channel counts occupy round_up(C, pack) sublanes.
    def _in_bytes_per_lane(x):
        isz = x.dtype.itemsize
        pack = 8 * (4 // isz)           # f32 -> 8, bf16 -> 16, int8/fp8 -> 32
        return 2 * N * _round_up(C, pack) * isz   # double-buffered block

    bytes_per_lane = (
        _in_bytes_per_lane(p) + _in_bytes_per_lane(t)   # two pipelined inputs
        + 2 * _round_up(N, 8) * 4                       # resident f32 partial-sum block (+ spare buffer)
        + 4 * N * _round_up(C, 8) * 4                   # allowance for in-kernel f32 temporaries
    )
    tile_hw = (vmem_budget // bytes_per_lane // LANE) * LANE
    if max_tile_hw is not None:
        tile_hw = min(tile_hw, max_tile_hw)
    tile_hw = min(tile_hw, _round_up(HW, LANE))
    # TODO(synk): if N*C is so large that even a 128-wide tile exceeds the
    # budget we would also have to tile N/C; here we clamp and rely on the
    # vmem_limit headroom instead.
    tile_hw = max(LANE, tile_hw)

    n_tiles = pl.cdiv(HW, tile_hw)
    needs_mask = (HW % tile_hw) != 0

    # Split the tile range into 2 contiguous groups when it divides evenly:
    # engages both TensorCores on v7x, no-op (but harmless) on 1-TC chips.
    n_par = 2 if (n_tiles % 2 == 0 and n_tiles >= 4) else 1
    n_steps = n_tiles // n_par

    kernel = _make_dice_kernel(n_steps, tile_hw, HW, needs_mask)

    partial = pl.pallas_call(
        kernel,
        out_shape=jax.ShapeDtypeStruct((n_par, N, tile_hw), jnp.float32),
        grid_spec=pltpu.PrefetchScalarGridSpec(
            num_scalar_prefetch=0,
            grid=(n_par, n_steps),
            in_specs=[
                pl.BlockSpec((N, C, tile_hw), lambda g, i: (0, 0, g * n_steps + i)),
                pl.BlockSpec((N, C, tile_hw), lambda g, i: (0, 0, g * n_steps + i)),
            ],
            out_specs=pl.BlockSpec((None, N, tile_hw), lambda g, i: (g, 0, 0)),
        ),
        compiler_params=pltpu.CompilerParams(
            dimension_semantics=("parallel", "arbitrary"),
            vmem_limit_bytes=vmem_limit,
        ),
    )(p, t)

    # Single final cross-lane reduce + mean over the TRUE element count
    # (masked / never-visited lanes contributed exactly 0 to the partials).
    return jnp.sum(partial) * (1.0 / (N * H * W))


def dice_loss_ref(pred: jax.Array, target: jax.Array) -> jax.Array:
    """Pure-JAX reference mirroring the PyTorch module exactly (NCHW, dim=1)."""
    pred = pred.astype(jnp.float32)
    target = target.astype(jnp.float32)
    num = jnp.sum(pred * target, axis=1) + 1.0
    den = jnp.sum(pred**2 + target**2, axis=1) + 1.0
    return jnp.mean(1.0 - num / den)


if __name__ == "__main__":
    key = jax.random.PRNGKey(0)
    k1, k2, k3, k4, k5, k6 = jax.random.split(key, 6)

    # Case 1: small NCHW (batch=2, channels=4, spatial=16x16) -> single tile.
    pred = jax.nn.sigmoid(jax.random.normal(k1, (2, 4, 16, 16), jnp.float32))
    target = (jax.random.uniform(k2, (2, 4, 16, 16)) > 0.5).astype(jnp.float32)
    loss = dice_loss(pred, target)
    jax.block_until_ready(loss)
    ref = dice_loss_ref(pred, target)
    assert jnp.allclose(loss, ref, atol=1e-5, rtol=1e-5), (loss, ref)

    # Case 2: non-tile-aligned spatial size with forced small tiles
    # (1920 = 7.5 * 256) -> exercises the 2-group "parallel" axis, the
    # resident accumulator across steps, and the in-kernel tail mask.
    pred2 = jax.nn.sigmoid(jax.random.normal(k3, (2, 3, 48, 40), jnp.float32))
    target2 = (jax.random.uniform(k4, (2, 3, 48, 40)) > 0.5).astype(jnp.float32)
    loss2 = dice_loss(pred2, target2, max_tile_hw=256)
    jax.block_until_ready(loss2)
    ref2 = dice_loss_ref(pred2, target2)
    assert jnp.allclose(loss2, ref2, atol=1e-5, rtol=1e-5), (loss2, ref2)

    # Case 3: bfloat16 inputs (half the HBM traffic), masked tail, small tiles.
    pred3 = jax.nn.sigmoid(jax.random.normal(k5, (2, 3, 24, 20), jnp.float32)).astype(jnp.bfloat16)
    target3 = (jax.random.uniform(k6, (2, 3, 24, 20)) > 0.5).astype(jnp.bfloat16)
    loss3 = dice_loss(pred3, target3, max_tile_hw=128)
    jax.block_until_ready(loss3)
    ref3 = dice_loss_ref(pred3, target3)
    assert jnp.allclose(loss3, ref3, atol=1e-5, rtol=1e-5), (loss3, ref3)

    print("KERNEL_OK")
</pallas_src>

<mosaic_0001>
module attributes {stable_mosaic.version = 11 : i64} {
  func.func @kernel(%arg0: i32, %arg1: i32, %arg2: memref<2x4x256xf32, #tpu.memory_space<vmem>>, %arg3: memref<2x4x256xf32, #tpu.memory_space<vmem>>, %arg4: memref<1x2x256xf32, #tpu.memory_space<vmem>>) attributes {dimension_semantics = [#tpu.dimension_semantics<parallel>, #tpu.dimension_semantics<arbitrary>], iteration_bounds = array<i64: 1, 1>, scalar_prefetch = 0 : i64, scratch_operands = 0 : i64, tpu.core_type = #tpu.core_type<tc>, window_params = [{transform_indices = @transform_0, window_bounds = array<i64: 2, 4, 256>}, {transform_indices = @transform_1, window_bounds = array<i64: 2, 4, 256>}, {transform_indices = @transform_2, window_bounds = array<i64: 1, 2, 256>}]} {
    %c0_i32 = arith.constant 0 : i32
    %0 = arith.cmpi eq, %arg1, %c0_i32 : i32
    %1 = arith.extui %0 : i1 to i32
    %c0_i32_0 = arith.constant 0 : i32
    %2 = arith.cmpi ne, %1, %c0_i32_0 : i32
    scf.if %2 {
      %cst_15 = arith.constant 0.000000e+00 : f32
      %24 = vector.broadcast %cst_15 : f32 to vector<2x256xf32>
      %c0_16 = arith.constant 0 : index
      %c0_17 = arith.constant 0 : index
      %c0_18 = arith.constant 0 : index
      %25 = vector.load %arg4[%c0_16, %c0_17, %c0_18] : memref<1x2x256xf32, #tpu.memory_space<vmem>>, vector<1x2x256xf32>
      %26 = vector.shape_cast %25 : vector<1x2x256xf32> to vector<2x256xf32>
      %27 = vector.shape_cast %24 : vector<2x256xf32> to vector<1x2x256xf32>
      tpu.vector_store %arg4[%c0_16, %c0_17, %c0_18], %27 {strides = array<i32>} : memref<1x2x256xf32, #tpu.memory_space<vmem>>, vector<1x2x256xf32>,
    } else {
    }
    %c0 = arith.constant 0 : index
    %c0_1 = arith.constant 0 : index
    %c0_2 = arith.constant 0 : index
    %3 = vector.load %arg2[%c0, %c0_1, %c0_2] : memref<2x4x256xf32, #tpu.memory_space<vmem>>, vector<2x4x256xf32>
    %c0_3 = arith.constant 0 : index
    %c0_4 = arith.constant 0 : index
    %c0_5 = arith.constant 0 : index
    %4 = vector.load %arg3[%c0_3, %c0_4, %c0_5] : memref<2x4x256xf32, #tpu.memory_space<vmem>>, vector<2x4x256xf32>
    %5 = arith.mulf %3, %4 : vector<2x4x256xf32>
    %cst = arith.constant dense<0.000000e+00> : vector<2x256xf32>
    %6 = vector.multi_reduction <add>, %5, %cst [1] : vector<2x4x256xf32> to vector<2x256xf32>
    %cst_6 = arith.constant 1.000000e+00 : f32
    %7 = vector.broadcast %cst_6 : f32 to vector<2x256xf32>
    %8 = arith.addf %6, %7 : vector<2x256xf32>
    %9 = arith.mulf %3, %3 : vector<2x4x256xf32>
    %10 = arith.mulf %4, %4 : vector<2x4x256xf32>
    %11 = arith.addf %9, %10 : vector<2x4x256xf32>
    %cst_7 = arith.constant dense<0.000000e+00> : vector<2x256xf32>
    %12 = vector.multi_reduction <add>, %11, %cst_7 [1] : vector<2x4x256xf32> to vector<2x256xf32>
    %cst_8 = arith.constant 1.000000e+00 : f32
    %13 = vector.broadcast %cst_8 : f32 to vector<2x256xf32>
    %14 = arith.addf %12, %13 : vector<2x256xf32>
    %15 = arith.subf %14, %8 : vector<2x256xf32>
    %16 = tpu.reciprocal %14 : vector<2x256xf32> -> vector<2x256xf32>
    %17 = arith.mulf %15, %16 : vector<2x256xf32>
    %c0_9 = arith.constant 0 : index
    %c0_10 = arith.constant 0 : index
    %c0_11 = arith.constant 0 : index
    %18 = vector.load %arg4[%c0_9, %c0_10, %c0_11] : memref<1x2x256xf32, #tpu.memory_space<vmem>>, vector<1x2x256xf32>
    %19 = vector.shape_cast %18 : vector<1x2x256xf32> to vector<2x256xf32>
    %20 = arith.addf %19, %17 : vector<2x256xf32>
    %c0_12 = arith.constant 0 : index
    %c0_13 = arith.constant 0 : index
    %c0_14 = arith.constant 0 : index
    %21 = vector.load %arg4[%c0_12, %c0_13, %c0_14] : memref<1x2x256xf32, #tpu.memory_space<vmem>>, vector<1x2x256xf32>
    %22 = vector.shape_cast %21 : vector<1x2x256xf32> to vector<2x256xf32>
    %23 = vector.shape_cast %20 : vector<2x256xf32> to vector<1x2x256xf32>
    tpu.vector_store %arg4[%c0_12, %c0_13, %c0_14], %23 {strides = array<i32>} : memref<1x2x256xf32, #tpu.memory_space<vmem>>, vector<1x2x256xf32>,
    return
  }
  func.func @transform_0(%arg0: i32, %arg1: i32) -> (i32, i32, i32) {
    %c1_i32 = arith.constant 1 : i32
    %0 = arith.muli %arg0, %c1_i32 : i32
    %1 = arith.addi %0, %arg1 : i32
    %c0_i32 = arith.constant 0 : i32
    %c0_i32_0 = arith.constant 0 : i32
    %c0_i32_1 = arith.constant 0 : i32
    return %c0_i32, %c0_i32_0, %1 : i32, i32, i32
  }
  func.func @transform_1(%arg0: i32, %arg1: i32) -> (i32, i32, i32) {
    %c1_i32 = arith.constant 1 : i32
    %0 = arith.muli %arg0, %c1_i32 : i32
    %1 = arith.addi %0, %arg1 : i32
    %c0_i32 = arith.constant 0 : i32
    %c0_i32_0 = arith.constant 0 : i32
    %c0_i32_1 = arith.constant 0 : i32
    return %c0_i32, %c0_i32_0, %1 : i32, i32, i32
  }
  func.func @transform_2(%arg0: i32, %arg1: i32) -> (i32, i32, i32) {
    %c0_i32 = arith.constant 0 : i32
    %c0_i32_0 = arith.constant 0 : i32
    %c0_i32_1 = arith.constant 0 : i32
    return %arg0, %c0_i32, %c0_i32_0 : i32, i32, i32
  }
}

</mosaic_0001>

<llo_original>
// kernel: tpu_custom_call.1
$region0: #{tpu_custom_call.1}
  #allocation0 [shape = 'u32[]', space=smem, size = 0x4, offset = 0x4, fixed_abs, tag = 'smem constant byte address 0x4 - core index']
  #allocation1 [shape = 'u32[72,128]{1,0:T(1,128)}', space=vmem, size = 0x9000, scoped, tag = 'internal scratch']
  %s0 = inlined_call_operand.hbm [shape: f32[2,4,256], index: 0, kind: input, shape index: {}]
  %s1 = inlined_call_operand.hbm [shape: f32[2,4,256], index: 1, kind: input, shape index: {}]
  %s2 = inlined_call_operand.hbm [shape: f32[1,2,256], index: 2, kind: output, shape index: {}]
  %s3 = sld [smem:[#allocation0]]
  $region30: #{tpu_custom_call.1} parent=0
    _
  %s5 = ssub.s32 1, %s3
  %s6 = scalar_select 0, %s5, %s3
  $region1: #{tpu_custom_call.1} parent=0
    #allocation2 [shape = 'u8[8192]{0}', space=vmem, size = 0x2000, scoped, tag = 'input window, operand 0, single buffered']
    #allocation3 [shape = 's32[1]{0}', space=sflag, size = 0x4, scoped, tag = 'scoped memory for tpu_custom_call.1']
    #allocation4 [shape = 's32[1]{0}', space=sflag, size = 0x4, scoped, tag = 'scoped memory for tpu_custom_call.1']
    #allocation5 [shape = 'u8[8192]{0}', space=vmem, size = 0x2000, scoped, tag = 'input window, operand 1, single buffered']
    #allocation6 [shape = 's32[1]{0}', space=sflag, size = 0x4, scoped, tag = 'scoped memory for tpu_custom_call.1']
    #allocation7 [shape = 'u8[2048]{0}', space=vmem, size = 0x800, scoped, tag = 'output window, operand 0, single buffered']
    %7 = vsyncpa [#allocation3], 0
    %8 = vsyncpa [#allocation6], 0
    %9 = vsyncpa [#allocation4], 0
    // Predicated region
    $region2: #{tpu_custom_call.1} parent=1 // pred_check
      _
    $region3: #{tpu_custom_call.1} parent=1 // pred_check_branch
      %11 = sbr.rel (0) target = $region5
    $region4: #{tpu_custom_call.1} parent=1 // pred_region
      %s12 = sadd.s32 0, 0
      %s13 = smul.u32 2, %s12
      %15 = vsyncadd [#allocation3], 0
      %s16 = smul.addr %s13, 4
      %s17 = scalar_lea.hbm %s0, %s16
      %s18 = sshll.u32 %s17, 4
      %s19 = int_to_ptr.hbm [resolvable:$true] %s18
      %s20 = sshll.u32 [#allocation2], 4
      %s21 = int_to_ptr.vmem [resolvable:$true] %s20
      %26 = dma.hbm_to_vmem [thread:$0]  %s19, 256, %s21, [#allocation3], 128, 128, 8
    $region5: #{tpu_custom_call.1} parent=1 // pred_fallthru
      _
    // Predicated region
    $region6: #{tpu_custom_call.1} parent=1 // pred_check
      _
    $region7: #{tpu_custom_call.1} parent=1 // pred_check_branch
      %28 = sbr.rel (0) target = $region9
    $region8: #{tpu_custom_call.1} parent=1 // pred_region
      %s29 = sadd.s32 0, 0
      %s30 = smul.u32 2, %s29
      %32 = vsyncadd [#allocation6], 0
      %s33 = smul.addr %s30, 4
      %s34 = scalar_lea.hbm %s1, %s33
      %s35 = sshll.u32 %s34, 4
      %s36 = int_to_ptr.hbm [resolvable:$true] %s35
      %s37 = sshll.u32 [#allocation5], 4
      %s38 = int_to_ptr.vmem [resolvable:$true] %s37
      %43 = dma.hbm_to_vmem [thread:$0]  %s36, 256, %s38, [#allocation6], 128, 128, 8
    $region9: #{tpu_custom_call.1} parent=1 // pred_fallthru
      _
    // Predicated region
    $region10: #{tpu_custom_call.1} parent=1 // pred_check
      _
    $region11: #{tpu_custom_call.1} parent=1 // pred_check_branch
      %45 = sbr.rel (0) target = $region13
    $region12: #{tpu_custom_call.1} parent=1 // pred_region
      %47 = dma.done [#allocation3], 256
    $region13: #{tpu_custom_call.1} parent=1 // pred_fallthru
      _
    // Predicated region
    $region14: #{tpu_custom_call.1} parent=1 // pred_check
      _
    $region15: #{tpu_custom_call.1} parent=1 // pred_check_branch
      %49 = sbr.rel (0) target = $region17
    $region16: #{tpu_custom_call.1} parent=1 // pred_region
      %51 = dma.done [#allocation6], 256
    $region17: #{tpu_custom_call.1} parent=1 // pred_fallthru
      _
    %s52 = sadd.s32 0, 0
    %s53 = smul.u32 2, %s52
    %s54 = sadd.s32 0, 0
    %s55 = smul.u32 2, %s54
    %p56 = scmp.eq.s32.totalorder 0, 0
    // Predicated region
    $region18: #{tpu_custom_call.1} parent=1 // pred_check
      %p57 = pneg %p56
    $region19: #{tpu_custom_call.1} parent=1 // pred_check_branch
      %59 = sbr.rel (%p57) target = $region21
    $region20: #{tpu_custom_call.1} parent=1 // pred_region
      %60 = vst [vmem:[#allocation7] sm:$0xf] 0.0
    $region21: #{tpu_custom_call.1} parent=1 // pred_fallthru
      _
    %v61 = vld [vmem:[#allocation2] sm:$0xff]
    %v62 = vld [vmem:[#allocation2 + $0x8] sm:$0xff]
    %v63 = vld [vmem:[#allocation5] sm:$0xff]
    %v64 = vld [vmem:[#allocation5 + $0x8] sm:$0xff]
    %v65 = vmul.f32 %v61, %v63
    %v66 = vmul.f32 %v62, %v64
    %69 = vst [vmem:[#allocation1] ss:$2 sm:$0xff] %v65
    %v70 = vld.sshfl [vmem:[#allocation1] sm:$0xff pattern:$0x75316420]
    %v71 = vld.sshfl [vmem:[#allocation1 + $0x8] sm:$0xff pattern:$0x75316420]
    %s72 = scalar_lea.vmem [#allocation1], 16
    %73 = vst [vmem:[%s72] ss:$2 sm:$0xff] %v66
    %v74 = vld.sshfl [vmem:[#allocation1 + $0x10] sm:$0xff pattern:$0x75316420]
    %v75 = vld.sshfl [vmem:[#allocation1 + $0x18] sm:$0xff pattern:$0x75316420]
    %vm80 = vcmask 1043456
    %v81 = vsel %vm80, %v70, 0.0
    %v82 = vrot.slane %v81, 4
    %v83 = vadd.f32 %v81, %v82
    %v84 = vrot.slane %v83, 2
    %v85 = vadd.f32 %v83, %v84
    %v86 = vrot.slane %v85, 1
    %v87 = vadd.f32 %v85, %v86
    %v88 = vsel %vm80, %v71, 0.0
    %v89 = vrot.slane %v88, 4
    %v90 = vadd.f32 %v88, %v89
    %v91 = vrot.slane %v90, 2
    %v92 = vadd.f32 %v90, %v91
    %v93 = vrot.slane %v92, 1
    %v94 = vadd.f32 %v92, %v93
    %v95 = vsel %vm80, %v74, 0.0
    %v96 = vrot.slane %v95, 4
    %v97 = vadd.f32 %v95, %v96
    %v98 = vrot.slane %v97, 2
    %v99 = vadd.f32 %v97, %v98
    %v100 = vrot.slane %v99, 1
    %v101 = vadd.f32 %v99, %v100
    %v102 = vsel %vm80, %v75, 0.0
    %v103 = vrot.slane %v102, 4
    %v104 = vadd.f32 %v102, %v103
    %v105 = vrot.slane %v104, 2
    %v106 = vadd.f32 %v104, %v105
    %v107 = vrot.slane %v106, 1
    %v108 = vadd.f32 %v106, %v107
    %v109 = vadd.f32 %v87, 1.0
    %v110 = vadd.f32 %v94, 1.0
    %v111 = vadd.f32 %v101, 1.0
    %v112 = vadd.f32 %v108, 1.0
    %v113 = vmul.f32 %v61, %v61
    %v114 = vmul.f32 %v62, %v62
    %v115 = vmul.f32 %v63, %v63
    %v116 = vmul.f32 %v64, %v64
    %v117 = vadd.f32 %v113, %v115
    %v118 = vadd.f32 %v114, %v116
    %121 = vst [vmem:[#allocation1] ss:$2 sm:$0xff] %v117
    %v122 = vld.sshfl [vmem:[#allocation1] sm:$0xff pattern:$0x75316420]
    %v123 = vld.sshfl [vmem:[#allocation1 + $0x8] sm:$0xff pattern:$0x75316420]
    %s124 = scalar_lea.vmem [#allocation1], 16
    %125 = vst [vmem:[%s124] ss:$2 sm:$0xff] %v118
    %v126 = vld.sshfl [vmem:[#allocation1 + $0x10] sm:$0xff pattern:$0x75316420]
    %v127 = vld.sshfl [vmem:[#allocation1 + $0x18] sm:$0xff pattern:$0x75316420]
    %v132 = vsel %vm80, %v122, 0.0
    %v133 = vrot.slane %v132, 4
    %v134 = vadd.f32 %v132, %v133
    %v135 = vrot.slane %v134, 2
    %v136 = vadd.f32 %v134, %v135
    %v137 = vrot.slane %v136, 1
    %v138 = vadd.f32 %v136, %v137
    %v139 = vsel %vm80, %v123, 0.0
    %v140 = vrot.slane %v139, 4
    %v141 = vadd.f32 %v139, %v140
    %v142 = vrot.slane %v141, 2
    %v143 = vadd.f32 %v141, %v142
    %v144 = vrot.slane %v143, 1
    %v145 = vadd.f32 %v143, %v144
    %v146 = vsel %vm80, %v126, 0.0
    %v147 = vrot.slane %v146, 4
    %v148 = vadd.f32 %v146, %v147
    %v149 = vrot.slane %v148, 2
    %v150 = vadd.f32 %v148, %v149
    %v151 = vrot.slane %v150, 1
    %v152 = vadd.f32 %v150, %v151
    %v153 = vsel %vm80, %v127, 0.0
    %v154 = vrot.slane %v153, 4
    %v155 = vadd.f32 %v153, %v154
    %v156 = vrot.slane %v155, 2
    %v157 = vadd.f32 %v155, %v156
    %v158 = vrot.slane %v157, 1
    %v159 = vadd.f32 %v157, %v158
    %v160 = vadd.f32 %v138, 1.0
    %v161 = vadd.f32 %v145, 1.0
    %v162 = vadd.f32 %v152, 1.0
    %v163 = vadd.f32 %v159, 1.0
    %v164 = vsub.f32 %v160, %v109
    %v165 = vsub.f32 %v161, %v110
    %v166 = vsub.f32 %v162, %v111
    %v167 = vsub.f32 %v163, %v112
    %v168 = vrcp.pop %v160
    %v169 = vmul.f32 %v160, %v168
    %v170 = vsub.f32 1.0, %v169
    %v171 = vmul.f32 %v168, %v170
    %v172 = vadd.f32 %v168, %v171
    %vm173 = vweird.f32 %v160
    %vm174 = vweird.f32 %v168
    %vm175 = vmor %vm173, %vm174
    %v176 = vsel %vm175, %v168, %v172
    %v177 = vand.u32 2147483647, %v160
    %vm178 = vcmp.eq.f32.partialorder %v177, 8.507059e+37
    %v179 = vand.u32 %v160, 2147483648
    %v180 = vor.u32 1.1754944e-38, %v179
    %v181 = vsel %vm178, %v180, %v176
    %v182 = vrcp.pop %v161
    %v183 = vmul.f32 %v161, %v182
    %v184 = vsub.f32 1.0, %v183
    %v185 = vmul.f32 %v182, %v184
    %v186 = vadd.f32 %v182, %v185
    %vm187 = vweird.f32 %v161
    %vm188 = vweird.f32 %v182
    %vm189 = vmor %vm187, %vm188
    %v190 = vsel %vm189, %v182, %v186
    %v191 = vand.u32 2147483647, %v161
    %vm192 = vcmp.eq.f32.partialorder %v191, 8.507059e+37
    %v193 = vand.u32 %v161, 2147483648
    %v194 = vor.u32 1.1754944e-38, %v193
    %v195 = vsel %vm192, %v194, %v190
    %v196 = vrcp.pop %v162
    %v197 = vmul.f32 %v162, %v196
    %v198 = vsub.f32 1.0, %v197
    %v199 = vmul.f32 %v196, %v198
    %v200 = vadd.f32 %v196, %v199
    %vm201 = vweird.f32 %v162
    %vm202 = vweird.f32 %v196
    %vm203 = vmor %vm201, %vm202
    %v204 = vsel %vm203, %v196, %v200
    %v205 = vand.u32 2147483647, %v162
    %vm206 = vcmp.eq.f32.partialorder %v205, 8.507059e+37
    %v207 = vand.u32 %v162, 2147483648
    %v208 = vor.u32 1.1754944e-38, %v207
    %v209 = vsel %vm206, %v208, %v204
    %v210 = vrcp.pop %v163
    %v211 = vmul.f32 %v163, %v210
    %v212 = vsub.f32 1.0, %v211
    %v213 = vmul.f32 %v210, %v212
    %v214 = vadd.f32 %v210, %v213
    %vm215 = vweird.f32 %v163
    %vm216 = vweird.f32 %v210
    %vm217 = vmor %vm215, %vm216
    %v218 = vsel %vm217, %v210, %v214
    %v219 = vand.u32 2147483647, %v163
    %vm220 = vcmp.eq.f32.partialorder %v219, 8.507059e+37
    %v221 = vand.u32 %v163, 2147483648
    %v222 = vor.u32 1.1754944e-38, %v221
    %v223 = vsel %vm220, %v222, %v218
    %v224 = vmul.f32 %v164, %v181
    %v225 = vmul.f32 %v165, %v195
    %v226 = vmul.f32 %v166, %v209
    %v227 = vmul.f32 %v167, %v223
    %v228 = vld [vmem:[#allocation7] sm:$0xf]
    %v233 = vrot.slane %v225, 6
    %v234 = vrot.slane %v227, 6
    %vm235 = vcmask 1041408
    %v236 = vsel %vm235, %v224, %v233
    %v237 = vsel %vm235, %v226, %v234
    %vm238 = vcmask 1044484
    %v239 = vsel %vm238, %v236, %v236
    %vm240 = vcmask 1046534
    %v241 = vsel %vm240, %v236, %v239
    %v242 = vrot.slane %v237, 7
    %vm243 = vcmask 1041409
    %v244 = vsel %vm243, %v242, %v241
    %vm245 = vcmask 1043459
    %v246 = vsel %vm245, %v242, %v244
    %vm247 = vcmask 1045509
    %v248 = vsel %vm247, %v242, %v246
    %vm249 = vcmask 1047559
    %v250 = vsel %vm249, %v242, %v248
    %v252 = vadd.f32 %v228, %v250
    %253 = vst [vmem:[#allocation7] sm:$0xf] %v252
    // Predicated region
    $region22: #{tpu_custom_call.1} parent=1 // pred_check
      _
    $region23: #{tpu_custom_call.1} parent=1 // pred_check_branch
      %255 = sbr.rel (0) target = $region25
    $region24: #{tpu_custom_call.1} parent=1 // pred_region
      %257 = vsyncadd [#allocation4], 0
      %s259 = sshll.u32 [#allocation7], 4
      %s260 = int_to_ptr.vmem [resolvable:$true] %s259
      %s261 = sshll.u32 %s2, 4
      %s262 = int_to_ptr.hbm [resolvable:$true] %s261
      %264 = dma.vmem_to_hbm [thread:$0]  %s260, 64, %s262, [#allocation4]
    $region25: #{tpu_custom_call.1} parent=1 // pred_fallthru
      _
    // Predicated region
    $region26: #{tpu_custom_call.1} parent=1 // pred_check
      _
    $region27: #{tpu_custom_call.1} parent=1 // pred_check_branch
      %266 = sbr.rel (0) target = $region29
    $region28: #{tpu_custom_call.1} parent=1 // pred_region
      %268 = dma.done [#allocation4], 64
    $region29: #{tpu_custom_call.1} parent=1 // pred_fallthru
      _
    %269 = vsyncpa [#allocation3], 1
    %270 = vsyncpa [#allocation6], 1
    %271 = vsyncpa [#allocation4], 1

</llo_original>
